<compile_context>
chip_gen: v6e
topology: v6e:2x2x1
jax: 0.10.0
libtpu: 0.0.40
codegen_flags: <defaults>
</compile_context>

<pallas_src>
from functools import partial

import jax
import jax.numpy as jnp
from jax import lax
from jax.experimental import pallas as pl
from jax.experimental.pallas import tpu as pltpu

NEG_SLOPE = 0.01  # PyTorch nn.LeakyReLU default


def _leaky(x):
    return jnp.where(x >= 0, x, NEG_SLOPE * x)


def _round_up(v, m):
    return -(-v // m) * m


def res_stack_kernel(xw_ref, w_ref, b_ref, o_ref, pad_ref, *,
                     L, TL, W, R, K, Cp, dilations, max_pad, matmul_dtype):
    """One grid step = one (batch element, L-tile).

    xw_ref:  (1, 1, Cp, W)        input window incl. R-wide halos on each side
    w_ref:   (6, Cp, K*Cp)        conv weights, taps flattened into the contraction dim
    b_ref:   (6, Cp, 1)           conv biases
    o_ref:   (1, Cp, TL)          output tile (exact interior of the window)
    pad_ref: (Cp, W + 2*max_pad)  persistent padded-activation scratch
    """
    # Zero ONLY the conv-halo columns (2*max_pad lanes); the interior is fully
    # overwritten every conv, so no full-buffer re-zeroing is needed.
    pad_ref[:, 0:max_pad] = jnp.zeros((Cp, max_pad), jnp.float32)
    pad_ref[:, max_pad + W:max_pad + W + max_pad] = jnp.zeros((Cp, max_pad), jnp.float32)

    # Validity mask over global positions: indices outside [0, L) must act as zeros
    # at every conv input (reproduces per-layer zero padding at the sequence edges
    # and makes the tail padding of the last tile inert).
    t = pl.program_id(1)
    gidx = t * TL + lax.broadcasted_iota(jnp.int32, (Cp, W), 1) - R
    valid = (gidx >= 0) & (gidx < L)

    xc = xw_ref[0, 0].astype(jnp.float32)          # (Cp, W) running residual

    for blk in range(3):                           # ResStack has 3 residual blocks
        h = xc
        for j, dil in enumerate(dilations):
            li = 2 * blk + j
            pad = (K - 1) * dil // 2

            # LeakyReLU + edge masking, written once into the fixed interior of the
            # padded scratch (the zero halos provide the conv's "same" padding).
            pad_ref[:, max_pad:max_pad + W] = jnp.where(valid, _leaky(h), 0.0)

            # im2col: K shifted views stacked along the sublane axis -> one matmul.
            # TODO(synk): tap slices are lane-misaligned (offsets 0..2*max_pad); a
            # pltpu.roll-based shift of the per-tap result would move that cost to
            # the idle XLU slot if it ever shows up in the bundle profile.
            cols = jnp.concatenate(
                [pad_ref[:, max_pad - pad + tt * dil:max_pad - pad + tt * dil + W]
                 for tt in range(K)],
                axis=0).astype(matmul_dtype)        # (K*Cp, W)

            h = jnp.dot(w_ref[li].astype(matmul_dtype), cols,
                        preferred_element_type=jnp.float32) + b_ref[li]
        xc = xc + h

    o_ref[0] = xc[:, R:R + TL].astype(o_ref.dtype)


def res_stack_forward(x, w_oik, b, kernel_size, dilations, *,
                      tl_max=512, matmul_dtype=jnp.float32):
    """x: (N, C, L); w_oik: (6, C_out, C_in, K) PyTorch OIH layout (weight-norm already
    resolved); b: (6, C). Returns (N, C, L)."""
    N, C, L = x.shape
    K = kernel_size
    n_convs = w_oik.shape[0]
    pads = tuple((K - 1) * d // 2 for d in dilations)
    max_pad = max(pads)
    R = 3 * sum(pads)                               # receptive-field halo of the 6-conv chain

    Cp = max(8, _round_up(C, 8))                    # sublane-pad the channel dim
    TL = min(_round_up(tl_max, 128), _round_up(L, 128))   # lane-aligned L tile
    T = -(-L // TL)
    W = TL + 2 * R

    # Zero-pad channels / length, then materialize overlapping windows (N, T, Cp, W).
    Lp = R + T * TL + R
    x_p = jnp.zeros((N, Cp, Lp), x.dtype).at[:, :C, R:R + L].set(x)
    starts = (jnp.arange(T) * TL)[:, None] + jnp.arange(W)[None, :]
    xw = jnp.transpose(x_p[:, :, starts], (0, 2, 1, 3))

    # Weights: (6, O, I, K) -> zero-pad to Cp -> (6, Cp, K*Cp), flattened as [tap, cin].
    w_p = jnp.zeros((n_convs, Cp, Cp, K), jnp.float32).at[:, :C, :C, :].set(w_oik)
    w_flat = jnp.transpose(w_p, (0, 1, 3, 2)).reshape(n_convs, Cp, K * Cp)
    w_flat = w_flat.astype(matmul_dtype)
    b_p = jnp.zeros((n_convs, Cp, 1), jnp.float32).at[:, :C, 0].set(b)

    kernel = partial(res_stack_kernel, L=L, TL=TL, W=W, R=R, K=K, Cp=Cp,
                     dilations=tuple(dilations), max_pad=max_pad,
                     matmul_dtype=matmul_dtype)

    flops = 2 * N * T * n_convs * Cp * (K * Cp) * W
    bytes_accessed = int(xw.size * xw.dtype.itemsize
                         + N * Cp * T * TL * x.dtype.itemsize
                         + w_flat.size * jnp.dtype(matmul_dtype).itemsize
                         + b_p.size * 4)

    out = pl.pallas_call(
        kernel,
        out_shape=jax.ShapeDtypeStruct((N, Cp, T * TL), x.dtype),
        grid=(N, T),
        in_specs=[
            pl.BlockSpec((1, 1, Cp, W), lambda n, t: (n, t, 0, 0)),
            pl.BlockSpec((n_convs, Cp, K * Cp), lambda n, t: (0, 0, 0)),
            pl.BlockSpec((n_convs, Cp, 1), lambda n, t: (0, 0, 0)),
        ],
        out_specs=pl.BlockSpec((1, Cp, TL), lambda n, t: (n, 0, t)),
        scratch_shapes=[pltpu.VMEM((Cp, W + 2 * max_pad), jnp.float32)],
        compiler_params=pltpu.CompilerParams(
            dimension_semantics=("parallel", "parallel"),
            vmem_limit_bytes=48 * 1024 * 1024),
        cost_estimate=pl.CostEstimate(flops=flops, transcendentals=0,
                                      bytes_accessed=bytes_accessed),
    )(xw, w_flat, b_p)

    return out[:, :C, :L]


def reference_res_stack(x, w_oik, b, kernel_size, dilations):
    """Pure-JAX reference (lax.conv) matching the PyTorch forward semantics."""
    K = kernel_size
    out = x
    for blk in range(3):
        h = out
        for j, dil in enumerate(dilations):
            li = 2 * blk + j
            h = jnp.where(h >= 0, h, NEG_SLOPE * h)
            pad = (K - 1) * dil // 2
            h = lax.conv_general_dilated(
                h, w_oik[li],
                window_strides=(1,),
                padding=[(pad, pad)],
                rhs_dilation=(dil,),
                dimension_numbers=("NCH", "OIH", "NCH"),
            ) + b[li][None, :, None]
        out = out + h
    return out


if __name__ == "__main__":
    # small shapes consistent with the module: ResStack(channel=4, kernel_size=3, dilations=(1,3))
    N, C, L = 2, 4, 16
    kernel_size = 3
    dilations = (1, 3)
    n_convs = 6  # 3 blocks x 2 convs

    key = jax.random.PRNGKey(0)
    k_v, k_g, k_b, k_x = jax.random.split(key, 4)

    # deterministic synthetic parameters with weight-norm reparameterization
    v = jax.random.normal(k_v, (n_convs, C, C, kernel_size), dtype=jnp.float32) * 0.1
    g = 1.0 + 0.1 * jax.random.normal(k_g, (n_convs, C), dtype=jnp.float32)
    b = 0.1 * jax.random.normal(k_b, (n_convs, C), dtype=jnp.float32)

    # effective conv weight: w = g * v / ||v||  (norm over (in_ch, tap) per out channel)
    v_norm = jnp.sqrt(jnp.sum(v * v, axis=(2, 3), keepdims=True))
    w_oik = g[:, :, None, None] * v / v_norm      # (6, C_out, C_in, K)  (PyTorch OIH)

    x = jax.random.normal(k_x, (N, C, L), dtype=jnp.float32)

    # f32 matmul operands here so the 1e-4 check holds; pass matmul_dtype=jnp.bfloat16
    # for production on v6e/v7x (accumulation stays f32).
    out = res_stack_forward(x, w_oik, b, kernel_size, dilations)
    out = jax.block_until_ready(out)

    ref = reference_res_stack(x, w_oik, b, kernel_size, dilations)
    assert out.shape == (N, C, L)
    assert jnp.allclose(out, ref, atol=1e-4, rtol=1e-4), "mismatch vs. pure-JAX reference"

    print("KERNEL_OK")
</pallas_src>

<mosaic_0001>
module attributes {stable_mosaic.version = 11 : i64} {
  func.func @res_stack_kernel(%arg0: i32, %arg1: i32, %arg2: memref<1x1x8x152xf32, #tpu.memory_space<vmem>>, %arg3: memref<6x8x24xf32, #tpu.memory_space<vmem>>, %arg4: memref<6x8x1xf32, #tpu.memory_space<vmem>>, %arg5: memref<1x8x128xf32, #tpu.memory_space<vmem>>, %arg6: memref<8x158xf32, #tpu.memory_space<vmem>>) attributes {dimension_semantics = [#tpu.dimension_semantics<parallel>, #tpu.dimension_semantics<parallel>], iteration_bounds = array<i64: 2, 1>, scalar_prefetch = 0 : i64, scratch_operands = 1 : i64, tpu.core_type = #tpu.core_type<tc>, window_params = [{transform_indices = @transform_0, window_bounds = array<i64: 1, 1, 8, 152>}, {pipeline_mode = #tpu.pipeline_mode<synchronous>, transform_indices = @transform_1, window_bounds = array<i64: 6, 8, 24>}, {pipeline_mode = #tpu.pipeline_mode<synchronous>, transform_indices = @transform_2, window_bounds = array<i64: 6, 8, 1>}, {transform_indices = @transform_3, window_bounds = array<i64: 1, 8, 128>}]} {
    %cst = arith.constant 0.000000e+00 : f32
    %0 = vector.broadcast %cst : f32 to vector<8x3xf32>
    %c0 = arith.constant 0 : index
    %c0_0 = arith.constant 0 : index
    %1 = vector.load %arg6[%c0, %c0_0] : memref<8x158xf32, #tpu.memory_space<vmem>>, vector<8x3xf32>
    tpu.vector_store %arg6[%c0, %c0_0], %0 {strides = array<i32>} : memref<8x158xf32, #tpu.memory_space<vmem>>, vector<8x3xf32>,
    %cst_1 = arith.constant 0.000000e+00 : f32
    %2 = vector.broadcast %cst_1 : f32 to vector<8x3xf32>
    %c0_2 = arith.constant 0 : index
    %c155 = arith.constant 155 : index
    %3 = vector.load %arg6[%c0_2, %c155] : memref<8x158xf32, #tpu.memory_space<vmem>>, vector<8x3xf32>
    tpu.vector_store %arg6[%c0_2, %c155], %2 {strides = array<i32>} : memref<8x158xf32, #tpu.memory_space<vmem>>, vector<8x3xf32>,
    %c128_i32 = arith.constant 128 : i32
    %4 = arith.muli %arg1, %c128_i32 : i32
    %5 = tpu.iota {dimensions = array<i32: 1>} : vector<8x152xi32>
    %6 = vector.broadcast %4 : i32 to vector<8x152xi32>
    %7 = arith.addi %6, %5 : vector<8x152xi32>
    %c12_i32 = arith.constant 12 : i32
    %8 = vector.broadcast %c12_i32 : i32 to vector<8x152xi32>
    %9 = arith.subi %7, %8 : vector<8x152xi32>
    %c0_i32 = arith.constant 0 : i32
    %10 = vector.broadcast %c0_i32 : i32 to vector<8x152xi32>
    %11 = arith.cmpi sge, %9, %10 : vector<8x152xi32>
    %c16_i32 = arith.constant 16 : i32
    %12 = vector.broadcast %c16_i32 : i32 to vector<8x152xi32>
    %13 = arith.cmpi slt, %9, %12 : vector<8x152xi32>
    %14 = arith.andi %11, %13 : vector<8x152xi1>
    %c0_3 = arith.constant 0 : index
    %c0_4 = arith.constant 0 : index
    %c0_5 = arith.constant 0 : index
    %c0_6 = arith.constant 0 : index
    %15 = vector.load %arg2[%c0_3, %c0_4, %c0_5, %c0_6] : memref<1x1x8x152xf32, #tpu.memory_space<vmem>>, vector<1x1x8x152xf32>
    %16 = vector.shape_cast %15 : vector<1x1x8x152xf32> to vector<8x152xf32>
    %cst_7 = arith.constant 0.000000e+00 : f32
    %17 = vector.broadcast %cst_7 : f32 to vector<8x152xf32>
    %18 = arith.cmpf oge, %16, %17 : vector<8x152xf32>
    %cst_8 = arith.constant 0.00999999977 : f32
    %19 = vector.broadcast %cst_8 : f32 to vector<8x152xf32>
    %20 = arith.mulf %19, %16 : vector<8x152xf32>
    %21 = arith.select %18, %16, %20 : vector<8x152xi1>, vector<8x152xf32>
    %cst_9 = arith.constant 0.000000e+00 : f32
    %22 = vector.broadcast %cst_9 : f32 to vector<8x152xf32>
    %23 = arith.select %14, %21, %22 : vector<8x152xi1>, vector<8x152xf32>
    %c0_10 = arith.constant 0 : index
    %c3 = arith.constant 3 : index
    %24 = vector.load %arg6[%c0_10, %c3] : memref<8x158xf32, #tpu.memory_space<vmem>>, vector<8x152xf32>
    tpu.vector_store %arg6[%c0_10, %c3], %23 {strides = array<i32>} : memref<8x158xf32, #tpu.memory_space<vmem>>, vector<8x152xf32>,
    %c0_11 = arith.constant 0 : index
    %c2 = arith.constant 2 : index
    %25 = vector.load %arg6[%c0_11, %c2] : memref<8x158xf32, #tpu.memory_space<vmem>>, vector<8x152xf32>
    %c0_12 = arith.constant 0 : index
    %c3_13 = arith.constant 3 : index
    %26 = vector.load %arg6[%c0_12, %c3_13] : memref<8x158xf32, #tpu.memory_space<vmem>>, vector<8x152xf32>
    %c0_14 = arith.constant 0 : index
    %c4 = arith.constant 4 : index
    %27 = vector.load %arg6[%c0_14, %c4] : memref<8x158xf32, #tpu.memory_space<vmem>>, vector<8x152xf32>
    %28 = tpu.concatenate %25, %26, %27 in 0 : vector<8x152xf32>, vector<8x152xf32>, vector<8x152xf32> -> vector<24x152xf32>
    %c0_15 = arith.constant 0 : index
    %c0_16 = arith.constant 0 : index
    %c0_17 = arith.constant 0 : index
    %29 = vector.load %arg3[%c0_15, %c0_16, %c0_17] : memref<6x8x24xf32, #tpu.memory_space<vmem>>, vector<1x8x24xf32>
    %30 = vector.shape_cast %29 : vector<1x8x24xf32> to vector<8x24xf32>
    %cst_18 = arith.constant dense<0.000000e+00> : vector<8x152xf32>
    %31 = tpu.matmul %30, %28, %cst_18 {dimension_numbers = #tpu.dot_dimension_numbers<[1], [0], [0], [1], [0, 0, 1, 1], [], []>} : vector<8x24xf32>, vector<24x152xf32>, vector<8x152xf32> -> vector<8x152xf32>
    %c0_19 = arith.constant 0 : index
    %c0_20 = arith.constant 0 : index
    %c0_21 = arith.constant 0 : index
    %32 = vector.load %arg4[%c0_19, %c0_20, %c0_21] : memref<6x8x1xf32, #tpu.memory_space<vmem>>, vector<1x8x1xf32>
    %33 = vector.shape_cast %32 : vector<1x8x1xf32> to vector<8x1xf32>
    %34 = vector.broadcast %33 : vector<8x1xf32> to vector<8x152xf32>
    %35 = arith.addf %31, %34 : vector<8x152xf32>
    %cst_22 = arith.constant 0.000000e+00 : f32
    %36 = vector.broadcast %cst_22 : f32 to vector<8x152xf32>
    %37 = arith.cmpf oge, %35, %36 : vector<8x152xf32>
    %cst_23 = arith.constant 0.00999999977 : f32
    %38 = vector.broadcast %cst_23 : f32 to vector<8x152xf32>
    %39 = arith.mulf %38, %35 : vector<8x152xf32>
    %40 = arith.select %37, %35, %39 : vector<8x152xi1>, vector<8x152xf32>
    %cst_24 = arith.constant 0.000000e+00 : f32
    %41 = vector.broadcast %cst_24 : f32 to vector<8x152xf32>
    %42 = arith.select %14, %40, %41 : vector<8x152xi1>, vector<8x152xf32>
    %c0_25 = arith.constant 0 : index
    %c3_26 = arith.constant 3 : index
    %43 = vector.load %arg6[%c0_25, %c3_26] : memref<8x158xf32, #tpu.memory_space<vmem>>, vector<8x152xf32>
    tpu.vector_store %arg6[%c0_25, %c3_26], %42 {strides = array<i32>} : memref<8x158xf32, #tpu.memory_space<vmem>>, vector<8x152xf32>,
    %c0_27 = arith.constant 0 : index
    %c0_28 = arith.constant 0 : index
    %44 = vector.load %arg6[%c0_27, %c0_28] : memref<8x158xf32, #tpu.memory_space<vmem>>, vector<8x152xf32>
    %c0_29 = arith.constant 0 : index
    %c3_30 = arith.constant 3 : index
    %45 = vector.load %arg6[%c0_29, %c3_30] : memref<8x158xf32, #tpu.memory_space<vmem>>, vector<8x152xf32>
    %c0_31 = arith.constant 0 : index
    %c6 = arith.constant 6 : index
    %46 = vector.load %arg6[%c0_31, %c6] : memref<8x158xf32, #tpu.memory_space<vmem>>, vector<8x152xf32>
    %47 = tpu.concatenate %44, %45, %46 in 0 : vector<8x152xf32>, vector<8x152xf32>, vector<8x152xf32> -> vector<24x152xf32>
    %c1 = arith.constant 1 : index
    %c0_32 = arith.constant 0 : index
    %c0_33 = arith.constant 0 : index
    %48 = vector.load %arg3[%c1, %c0_32, %c0_33] : memref<6x8x24xf32, #tpu.memory_space<vmem>>, vector<1x8x24xf32>
    %49 = vector.shape_cast %48 : vector<1x8x24xf32> to vector<8x24xf32>
    %cst_34 = arith.constant dense<0.000000e+00> : vector<8x152xf32>
    %50 = tpu.matmul %49, %47, %cst_34 {dimension_numbers = #tpu.dot_dimension_numbers<[1], [0], [0], [1], [0, 0, 1, 1], [], []>} : vector<8x24xf32>, vector<24x152xf32>, vector<8x152xf32> -> vector<8x152xf32>
    %c1_35 = arith.constant 1 : index
    %c0_36 = arith.constant 0 : index
    %c0_37 = arith.constant 0 : index
    %51 = vector.load %arg4[%c1_35, %c0_36, %c0_37] : memref<6x8x1xf32, #tpu.memory_space<vmem>>, vector<1x8x1xf32>
    %52 = vector.shape_cast %51 : vector<1x8x1xf32> to vector<8x1xf32>
    %53 = vector.broadcast %52 : vector<8x1xf32> to vector<8x152xf32>
    %54 = arith.addf %50, %53 : vector<8x152xf32>
    %55 = arith.addf %16, %54 : vector<8x152xf32>
    %cst_38 = arith.constant 0.000000e+00 : f32
    %56 = vector.broadcast %cst_38 : f32 to vector<8x152xf32>
    %57 = arith.cmpf oge, %55, %56 : vector<8x152xf32>
    %cst_39 = arith.constant 0.00999999977 : f32
    %58 = vector.broadcast %cst_39 : f32 to vector<8x152xf32>
    %59 = arith.mulf %58, %55 : vector<8x152xf32>
    %60 = arith.select %57, %55, %59 : vector<8x152xi1>, vector<8x152xf32>
    %cst_40 = arith.constant 0.000000e+00 : f32
    %61 = vector.broadcast %cst_40 : f32 to vector<8x152xf32>
    %62 = arith.select %14, %60, %61 : vector<8x152xi1>, vector<8x152xf32>
    %c0_41 = arith.constant 0 : index
    %c3_42 = arith.constant 3 : index
    %63 = vector.load %arg6[%c0_41, %c3_42] : memref<8x158xf32, #tpu.memory_space<vmem>>, vector<8x152xf32>
    tpu.vector_store %arg6[%c0_41, %c3_42], %62 {strides = array<i32>} : memref<8x158xf32, #tpu.memory_space<vmem>>, vector<8x152xf32>,
    %c0_43 = arith.constant 0 : index
    %c2_44 = arith.constant 2 : index
    %64 = vector.load %arg6[%c0_43, %c2_44] : memref<8x158xf32, #tpu.memory_space<vmem>>, vector<8x152xf32>
    %c0_45 = arith.constant 0 : index
    %c3_46 = arith.constant 3 : index
    %65 = vector.load %arg6[%c0_45, %c3_46] : memref<8x158xf32, #tpu.memory_space<vmem>>, vector<8x152xf32>
    %c0_47 = arith.constant 0 : index
    %c4_48 = arith.constant 4 : index
    %66 = vector.load %arg6[%c0_47, %c4_48] : memref<8x158xf32, #tpu.memory_space<vmem>>, vector<8x152xf32>
    %67 = tpu.concatenate %64, %65, %66 in 0 : vector<8x152xf32>, vector<8x152xf32>, vector<8x152xf32> -> vector<24x152xf32>
    %c2_49 = arith.constant 2 : index
    %c0_50 = arith.constant 0 : index
    %c0_51 = arith.constant 0 : index
    %68 = vector.load %arg3[%c2_49, %c0_50, %c0_51] : memref<6x8x24xf32, #tpu.memory_space<vmem>>, vector<1x8x24xf32>
    %69 = vector.shape_cast %68 : vector<1x8x24xf32> to vector<8x24xf32>
    %cst_52 = arith.constant dense<0.000000e+00> : vector<8x152xf32>
    %70 = tpu.matmul %69, %67, %cst_52 {dimension_numbers = #tpu.dot_dimension_numbers<[1], [0], [0], [1], [0, 0, 1, 1], [], []>} : vector<8x24xf32>, vector<24x152xf32>, vector<8x152xf32> -> vector<8x152xf32>
    %c2_53 = arith.constant 2 : index
    %c0_54 = arith.constant 0 : index
    %c0_55 = arith.constant 0 : index
    %71 = vector.load %arg4[%c2_53, %c0_54, %c0_55] : memref<6x8x1xf32, #tpu.memory_space<vmem>>, vector<1x8x1xf32>
    %72 = vector.shape_cast %71 : vector<1x8x1xf32> to vector<8x1xf32>
    %73 = vector.broadcast %72 : vector<8x1xf32> to vector<8x152xf32>
    %74 = arith.addf %70, %73 : vector<8x152xf32>
    %cst_56 = arith.constant 0.000000e+00 : f32
    %75 = vector.broadcast %cst_56 : f32 to vector<8x152xf32>
    %76 = arith.cmpf oge, %74, %75 : vector<8x152xf32>
    %cst_57 = arith.constant 0.00999999977 : f32
    %77 = vector.broadcast %cst_57 : f32 to vector<8x152xf32>
    %78 = arith.mulf %77, %74 : vector<8x152xf32>
    %79 = arith.select %76, %74, %78 : vector<8x152xi1>, vector<8x152xf32>
    %cst_58 = arith.constant 0.000000e+00 : f32
    %80 = vector.broadcast %cst_58 : f32 to vector<8x152xf32>
    %81 = arith.select %14, %79, %80 : vector<8x152xi1>, vector<8x152xf32>
    %c0_59 = arith.constant 0 : index
    %c3_60 = arith.constant 3 : index
    %82 = vector.load %arg6[%c0_59, %c3_60] : memref<8x158xf32, #tpu.memory_space<vmem>>, vector<8x152xf32>
    tpu.vector_store %arg6[%c0_59, %c3_60], %81 {strides = array<i32>} : memref<8x158xf32, #tpu.memory_space<vmem>>, vector<8x152xf32>,
    %c0_61 = arith.constant 0 : index
    %c0_62 = arith.constant 0 : index
    %83 = vector.load %arg6[%c0_61, %c0_62] : memref<8x158xf32, #tpu.memory_space<vmem>>, vector<8x152xf32>
    %c0_63 = arith.constant 0 : index
    %c3_64 = arith.constant 3 : index
    %84 = vector.load %arg6[%c0_63, %c3_64] : memref<8x158xf32, #tpu.memory_space<vmem>>, vector<8x152xf32>
    %c0_65 = arith.constant 0 : index
    %c6_66 = arith.constant 6 : index
    %85 = vector.load %arg6[%c0_65, %c6_66] : memref<8x158xf32, #tpu.memory_space<vmem>>, vector<8x152xf32>
    %86 = tpu.concatenate %83, %84, %85 in 0 : vector<8x152xf32>, vector<8x152xf32>, vector<8x152xf32> -> vector<24x152xf32>
    %c3_67 = arith.constant 3 : index
    %c0_68 = arith.constant 0 : index
    %c0_69 = arith.constant 0 : index
    %87 = vector.load %arg3[%c3_67, %c0_68, %c0_69] : memref<6x8x24xf32, #tpu.memory_space<vmem>>, vector<1x8x24xf32>
    %88 = vector.shape_cast %87 : vector<1x8x24xf32> to vector<8x24xf32>
    %cst_70 = arith.constant dense<0.000000e+00> : vector<8x152xf32>
    %89 = tpu.matmul %88, %86, %cst_70 {dimension_numbers = #tpu.dot_dimension_numbers<[1], [0], [0], [1], [0, 0, 1, 1], [], []>} : vector<8x24xf32>, vector<24x152xf32>, vector<8x152xf32> -> vector<8x152xf32>
    %c3_71 = arith.constant 3 : index
    %c0_72 = arith.constant 0 : index
    %c0_73 = arith.constant 0 : index
    %90 = vector.load %arg4[%c3_71, %c0_72, %c0_73] : memref<6x8x1xf32, #tpu.memory_space<vmem>>, vector<1x8x1xf32>
    %91 = vector.shape_cast %90 : vector<1x8x1xf32> to vector<8x1xf32>
    %92 = vector.broadcast %91 : vector<8x1xf32> to vector<8x152xf32>
    %93 = arith.addf %89, %92 : vector<8x152xf32>
    %94 = arith.addf %55, %93 : vector<8x152xf32>
    %cst_74 = arith.constant 0.000000e+00 : f32
    %95 = vector.broadcast %cst_74 : f32 to vector<8x152xf32>
    %96 = arith.cmpf oge, %94, %95 : vector<8x152xf32>
    %cst_75 = arith.constant 0.00999999977 : f32
    %97 = vector.broadcast %cst_75 : f32 to vector<8x152xf32>
    %98 = arith.mulf %97, %94 : vector<8x152xf32>
    %99 = arith.select %96, %94, %98 : vector<8x152xi1>, vector<8x152xf32>
    %cst_76 = arith.constant 0.000000e+00 : f32
    %100 = vector.broadcast %cst_76 : f32 to vector<8x152xf32>
    %101 = arith.select %14, %99, %100 : vector<8x152xi1>, vector<8x152xf32>
    %c0_77 = arith.constant 0 : index
    %c3_78 = arith.constant 3 : index
    %102 = vector.load %arg6[%c0_77, %c3_78] : memref<8x158xf32, #tpu.memory_space<vmem>>, vector<8x152xf32>
    tpu.vector_store %arg6[%c0_77, %c3_78], %101 {strides = array<i32>} : memref<8x158xf32, #tpu.memory_space<vmem>>, vector<8x152xf32>,
    %c0_79 = arith.constant 0 : index
    %c2_80 = arith.constant 2 : index
    %103 = vector.load %arg6[%c0_79, %c2_80] : memref<8x158xf32, #tpu.memory_space<vmem>>, vector<8x152xf32>
    %c0_81 = arith.constant 0 : index
    %c3_82 = arith.constant 3 : index
    %104 = vector.load %arg6[%c0_81, %c3_82] : memref<8x158xf32, #tpu.memory_space<vmem>>, vector<8x152xf32>
    %c0_83 = arith.constant 0 : index
    %c4_84 = arith.constant 4 : index
    %105 = vector.load %arg6[%c0_83, %c4_84] : memref<8x158xf32, #tpu.memory_space<vmem>>, vector<8x152xf32>
    %106 = tpu.concatenate %103, %104, %105 in 0 : vector<8x152xf32>, vector<8x152xf32>, vector<8x152xf32> -> vector<24x152xf32>
    %c4_85 = arith.constant 4 : index
    %c0_86 = arith.constant 0 : index
    %c0_87 = arith.constant 0 : index
    %107 = vector.load %arg3[%c4_85, %c0_86, %c0_87] : memref<6x8x24xf32, #tpu.memory_space<vmem>>, vector<1x8x24xf32>
    %108 = vector.shape_cast %107 : vector<1x8x24xf32> to vector<8x24xf32>
    %cst_88 = arith.constant dense<0.000000e+00> : vector<8x152xf32>
    %109 = tpu.matmul %108, %106, %cst_88 {dimension_numbers = #tpu.dot_dimension_numbers<[1], [0], [0], [1], [0, 0, 1, 1], [], []>} : vector<8x24xf32>, vector<24x152xf32>, vector<8x152xf32> -> vector<8x152xf32>
    %c4_89 = arith.constant 4 : index
    %c0_90 = arith.constant 0 : index
    %c0_91 = arith.constant 0 : index
    %110 = vector.load %arg4[%c4_89, %c0_90, %c0_91] : memref<6x8x1xf32, #tpu.memory_space<vmem>>, vector<1x8x1xf32>
    %111 = vector.shape_cast %110 : vector<1x8x1xf32> to vector<8x1xf32>
    %112 = vector.broadcast %111 : vector<8x1xf32> to vector<8x152xf32>
    %113 = arith.addf %109, %112 : vector<8x152xf32>
    %cst_92 = arith.constant 0.000000e+00 : f32
    %114 = vector.broadcast %cst_92 : f32 to vector<8x152xf32>
    %115 = arith.cmpf oge, %113, %114 : vector<8x152xf32>
    %cst_93 = arith.constant 0.00999999977 : f32
    %116 = vector.broadcast %cst_93 : f32 to vector<8x152xf32>
    %117 = arith.mulf %116, %113 : vector<8x152xf32>
    %118 = arith.select %115, %113, %117 : vector<8x152xi1>, vector<8x152xf32>
    %cst_94 = arith.constant 0.000000e+00 : f32
    %119 = vector.broadcast %cst_94 : f32 to vector<8x152xf32>
    %120 = arith.select %14, %118, %119 : vector<8x152xi1>, vector<8x152xf32>
    %c0_95 = arith.constant 0 : index
    %c3_96 = arith.constant 3 : index
    %121 = vector.load %arg6[%c0_95, %c3_96] : memref<8x158xf32, #tpu.memory_space<vmem>>, vector<8x152xf32>
    tpu.vector_store %arg6[%c0_95, %c3_96], %120 {strides = array<i32>} : memref<8x158xf32, #tpu.memory_space<vmem>>, vector<8x152xf32>,
    %c0_97 = arith.constant 0 : index
    %c0_98 = arith.constant 0 : index
    %122 = vector.load %arg6[%c0_97, %c0_98] : memref<8x158xf32, #tpu.memory_space<vmem>>, vector<8x152xf32>
    %c0_99 = arith.constant 0 : index
    %c3_100 = arith.constant 3 : index
    %123 = vector.load %arg6[%c0_99, %c3_100] : memref<8x158xf32, #tpu.memory_space<vmem>>, vector<8x152xf32>
    %c0_101 = arith.constant 0 : index
    %c6_102 = arith.constant 6 : index
    %124 = vector.load %arg6[%c0_101, %c6_102] : memref<8x158xf32, #tpu.memory_space<vmem>>, vector<8x152xf32>
    %125 = tpu.concatenate %122, %123, %124 in 0 : vector<8x152xf32>, vector<8x152xf32>, vector<8x152xf32> -> vector<24x152xf32>
    %c5 = arith.constant 5 : index
    %c0_103 = arith.constant 0 : index
    %c0_104 = arith.constant 0 : index
    %126 = vector.load %arg3[%c5, %c0_103, %c0_104] : memref<6x8x24xf32, #tpu.memory_space<vmem>>, vector<1x8x24xf32>
    %127 = vector.shape_cast %126 : vector<1x8x24xf32> to vector<8x24xf32>
    %cst_105 = arith.constant dense<0.000000e+00> : vector<8x152xf32>
    %128 = tpu.matmul %127, %125, %cst_105 {dimension_numbers = #tpu.dot_dimension_numbers<[1], [0], [0], [1], [0, 0, 1, 1], [], []>} : vector<8x24xf32>, vector<24x152xf32>, vector<8x152xf32> -> vector<8x152xf32>
    %c5_106 = arith.constant 5 : index
    %c0_107 = arith.constant 0 : index
    %c0_108 = arith.constant 0 : index
    %129 = vector.load %arg4[%c5_106, %c0_107, %c0_108] : memref<6x8x1xf32, #tpu.memory_space<vmem>>, vector<1x8x1xf32>
    %130 = vector.shape_cast %129 : vector<1x8x1xf32> to vector<8x1xf32>
    %131 = vector.broadcast %130 : vector<8x1xf32> to vector<8x152xf32>
    %132 = arith.addf %128, %131 : vector<8x152xf32>
    %133 = arith.addf %94, %132 : vector<8x152xf32>
    %134 = vector.extract_strided_slice %133 {offsets = [0, 12], sizes = [8, 128], strides = [1, 1]} : vector<8x152xf32> to vector<8x128xf32>
    %c0_109 = arith.constant 0 : index
    %c0_110 = arith.constant 0 : index
    %c0_111 = arith.constant 0 : index
    %135 = vector.load %arg5[%c0_109, %c0_110, %c0_111] : memref<1x8x128xf32, #tpu.memory_space<vmem>>, vector<1x8x128xf32>
    %136 = vector.shape_cast %135 : vector<1x8x128xf32> to vector<8x128xf32>
    %137 = vector.shape_cast %134 : vector<8x128xf32> to vector<1x8x128xf32>
    tpu.vector_store %arg5[%c0_109, %c0_110, %c0_111], %137 {strides = array<i32>} : memref<1x8x128xf32, #tpu.memory_space<vmem>>, vector<1x8x128xf32>,
    return
  }
  func.func @transform_0(%arg0: i32, %arg1: i32) -> (i32, i32, i32, i32) {
    %c0_i32 = arith.constant 0 : i32
    %c0_i32_0 = arith.constant 0 : i32
    %c0_i32_1 = arith.constant 0 : i32
    return %arg0, %arg1, %c0_i32, %c0_i32_0 : i32, i32, i32, i32
  }
  func.func @transform_1(%arg0: i32, %arg1: i32) -> (i32, i32, i32) {
    %c0_i32 = arith.constant 0 : i32
    %c0_i32_0 = arith.constant 0 : i32
    %c0_i32_1 = arith.constant 0 : i32
    %c0_i32_2 = arith.constant 0 : i32
    return %c0_i32, %c0_i32_0, %c0_i32_1 : i32, i32, i32
  }
  func.func @transform_2(%arg0: i32, %arg1: i32) -> (i32, i32, i32) {
    %c0_i32 = arith.constant 0 : i32
    %c0_i32_0 = arith.constant 0 : i32
    %c0_i32_1 = arith.constant 0 : i32
    %c0_i32_2 = arith.constant 0 : i32
    return %c0_i32, %c0_i32_0, %c0_i32_1 : i32, i32, i32
  }
  func.func @transform_3(%arg0: i32, %arg1: i32) -> (i32, i32, i32) {
    %c0_i32 = arith.constant 0 : i32
    %c0_i32_0 = arith.constant 0 : i32
    return %arg0, %c0_i32, %arg1 : i32, i32, i32
  }
}

</mosaic_0001>

<llo_original>
// kernel: tpu_custom_call.1
$region0: #{tpu_custom_call.1}
  #allocation0 [shape = 'u32[]', space=smem, size = 0x4, offset = 0x4, fixed_abs, tag = 'smem constant byte address 0x4 - core index']
  #allocation1 [shape = 'u32[144,128]{1,0:T(1,128)}', space=vmem, size = 0x12000, scoped, tag = 'internal scratch']
  #allocation2 [shape = 'f32[8,158]{1,0:T(8,128)}', space=vmem, size = 0x2000, scoped, tag = 'scratch operand']
  %s0 = inlined_call_operand.hbm [shape: f32[2,1,8,152], index: 0, kind: input, shape index: {}]
  %s1 = inlined_call_operand.vmem [shape: f32[6,8,24], index: 1, kind: input, shape index: {}]
  %s2 = inlined_call_operand.vmem [shape: f32[6,8,1], index: 2, kind: input, shape index: {}]
  %s3 = inlined_call_operand.hbm [shape: f32[2,8,128], index: 3, kind: output, shape index: {}]
  %s4 = sld [smem:[#allocation0]]
  $region49: #{tpu_custom_call.1} parent=0
    _
  %s6 = ssub.s32 1, %s4
  %s7 = scalar_select 0, %s6, %s4
  $region1: #{tpu_custom_call.1} parent=0
    #allocation3 [shape = 'u8[16384]{0}', space=vmem, size = 0x4000, scoped, tag = 'input window, operand 0']
    #allocation4 [shape = 's32[2]{0}', space=sflag, size = 0x8, scoped, tag = 'scoped memory for tpu_custom_call.1']
    #allocation5 [shape = 's32[2]{0}', space=sflag, size = 0x8, scoped, tag = 'scoped memory for tpu_custom_call.1']
    #allocation6 [shape = 'u8[8192]{0}', space=vmem, size = 0x2000, scoped, tag = 'output window, operand 0']
    %8 = vsyncpa [#allocation4], 0
    %s9 = scalar_lea.sflag [#allocation4], 1
    %10 = vsyncpa %s9, 0
    %11 = vsyncpa [#allocation5], 0
    %s12 = scalar_lea.sflag [#allocation5], 1
    %13 = vsyncpa %s12, 0
    loop: start=0, step=1, limit=4
    $region2: #{tpu_custom_call.1} parent=1 // loop_pre_header
      _
    $region3: #{tpu_custom_call.1} parent=1 // loop_header
      %s15 = sphi 0, %s19
      %p16 = scmp.ge.s32.totalorder %s15, 4
      %s22 = sphi 0, %s34
      %s23 = sphi 0, %s30
      %s24 = sphi 0, %s22
      %s25 = sphi 0, %s23
      %s26 = sphi 0, %s24
      %s27 = sphi 0, %s25
      %s39 = sphi 0, %s41
      %s42 = sphi 0, %s39
      %s43 = sphi 0, %s42
      %s59 = sphi 0, %s43
      %s63 = sphi 0, %s63
      %s65 = sphi 0, %s63
      %s66 = sphi 0, %s65
      %s80 = sphi 0, %s66
      %s84 = sphi 0, %s84
      %s86 = sphi 0, %s84
      %s87 = sphi 0, %s86
      %s101 = sphi 0, %s87
      %s109 = sphi 0, %s111
      %s112 = sphi 0, %s109
      %s113 = sphi 0, %s112
      %s129 = sphi 0, %s113
    $region4: #{tpu_custom_call.1} parent=1 // loop_header_branch
      %18 = sbr.rel (%p16) target = $region8
    $region5: #{tpu_custom_call.1} parent=1 // loop_body
      %s20 = ssub.s32 %s15, 1
      %s21 = ssub.s32 %s15, 2
      %s28 = sadd.s32 1, %s23
      %p29 = scmp.ge.s32.totalorder %s28, 1
      %s30 = scalar_select %p29, 0, %s28
      %s31 = sadd.s32 1, %s22
      %s32 = scalar_select %p29, %s31, %s22
      %p33 = scmp.ge.s32.totalorder %s32, 2
      %s34 = scalar_select %p33, 0, %s32
      %s35 = ssub.s32 %s22, %s34
      %s36 = ssub.s32 %s23, %s30
      %s37 = sor.u32 %s35, %s36
      %p38 = scmp.eq.s32.totalorder %s37, 0
      %s40 = sadd.s32 %s39, 1
      %s41 = scalar_select %p38, %s39, %s40
      %p44 = pneg %p38
      %p45 = scmp.eq.s32.totalorder %s15, 1
      %p46 = por %p44, %p45
      %p47 = scmp.ne.s32.totalorder %s39, %s42
      %p48 = scmp.eq.s32.totalorder %s15, 0
      %p49 = por %p47, %p48
      %p50 = scmp.ne.s32.totalorder %s39, %s42
      %p51 = scmp.eq.s32.totalorder %s20, 1
      %p52 = por %p50, %p51
      %p53 = scmp.ne.s32.totalorder %s42, %s43
      %p54 = scmp.eq.s32.totalorder %s20, 0
      %p55 = por %p53, %p54
      %p56 = scmp.ne.s32.totalorder %s42, %s43
      %p57 = scmp.eq.s32.totalorder %s21, 1
      %p58 = por %p56, %p57
      %p60 = scmp.ne.s32.totalorder %s43, %s59
      %p61 = scmp.eq.s32.totalorder %s21, 0
      %p62 = por %p60, %p61
      %s64 = sadd.s32 %s63, 1
      %p67 = scmp.eq.s32.totalorder %s15, 1
      %p68 = scmp.ne.s32.totalorder %s63, %s65
      %p69 = scmp.eq.s32.totalorder %s15, 0
      %p70 = por %p68, %p69
      %p71 = scmp.ne.s32.totalorder %s63, %s65
      %p72 = scmp.eq.s32.totalorder %s20, 1
      %p73 = por %p71, %p72
      %p74 = scmp.ne.s32.totalorder %s65, %s66
      %p75 = scmp.eq.s32.totalorder %s20, 0
      %p76 = por %p74, %p75
      %p77 = scmp.ne.s32.totalorder %s65, %s66
      %p78 = scmp.eq.s32.totalorder %s21, 1
      %p79 = por %p77, %p78
      %p81 = scmp.ne.s32.totalorder %s66, %s80
      %p82 = scmp.eq.s32.totalorder %s21, 0
      %p83 = por %p81, %p82
      %s85 = sadd.s32 %s84, 1
      %p88 = scmp.eq.s32.totalorder %s15, 1
      %p89 = scmp.ne.s32.totalorder %s84, %s86
      %p90 = scmp.eq.s32.totalorder %s15, 0
      %p91 = por %p89, %p90
      %p92 = scmp.ne.s32.totalorder %s84, %s86
      %p93 = scmp.eq.s32.totalorder %s20, 1
      %p94 = por %p92, %p93
      %p95 = scmp.ne.s32.totalorder %s86, %s87
      %p96 = scmp.eq.s32.totalorder %s20, 0
      %p97 = por %p95, %p96
      %p98 = scmp.ne.s32.totalorder %s86, %s87
      %p99 = scmp.eq.s32.totalorder %s21, 1
      %p100 = por %p98, %p99
      %p102 = scmp.ne.s32.totalorder %s87, %s101
      %p103 = scmp.eq.s32.totalorder %s21, 0
      %p104 = por %p102, %p103
      %s105 = ssub.s32 %s22, %s34
      %s106 = ssub.s32 %s23, %s30
      %s107 = sor.u32 %s105, %s106
      %p108 = scmp.eq.s32.totalorder %s107, 0
      %s110 = sadd.s32 %s109, 1
      %s111 = scalar_select %p108, %s109, %s110
      %p114 = pneg %p108
      %p115 = scmp.eq.s32.totalorder %s15, 1
      %p116 = por %p114, %p115
      %p117 = scmp.ne.s32.totalorder %s109, %s112
      %p118 = scmp.eq.s32.totalorder %s15, 0
      %p119 = por %p117, %p118
      %p120 = scmp.ne.s32.totalorder %s109, %s112
      %p121 = scmp.eq.s32.totalorder %s20, 1
      %p122 = por %p120, %p121
      %p123 = scmp.ne.s32.totalorder %s112, %s113
      %p124 = scmp.eq.s32.totalorder %s20, 0
      %p125 = por %p123, %p124
      %p126 = scmp.ne.s32.totalorder %s112, %s113
      %p127 = scmp.eq.s32.totalorder %s21, 1
      %p128 = por %p126, %p127
      %p130 = scmp.ne.s32.totalorder %s113, %s129
      %p131 = scmp.eq.s32.totalorder %s21, 0
      %p132 = por %p130, %p131
      %p133 = scmp.le.s32.totalorder 1, %s15
      %p134 = scmp.lt.s32.totalorder %s15, 3
      %p135 = pnand %p133, %p134
      %p136 = pneg %p135
      // Predicated region
      $region9: #{tpu_custom_call.1} parent=5 // pred_check
        _
      $region10: #{tpu_custom_call.1} parent=5 // pred_check_branch
        %138 = sbr.rel (%p135) target = $region12
      $region11: #{tpu_custom_call.1} parent=5 // pred_region
        %s139 = ssub.s32 %s15, 1
        // Predicated region
        $region13: #{tpu_custom_call.1} parent=11 // pred_check
          %p140 = pneg %p76
        $region14: #{tpu_custom_call.1} parent=11 // pred_check_branch
          %142 = sbr.rel (%p140) target = $region16
        $region15: #{tpu_custom_call.1} parent=11 // pred_region
          _
        $region16: #{tpu_custom_call.1} parent=11 // pred_fallthru
          _
        // Predicated region
        $region17: #{tpu_custom_call.1} parent=11 // pred_check
          %p143 = pneg %p97
        $region18: #{tpu_custom_call.1} parent=11 // pred_check_branch
          %145 = sbr.rel (%p143) target = $region20
        $region19: #{tpu_custom_call.1} parent=11 // pred_region
          _
        $region20: #{tpu_custom_call.1} parent=11 // pred_fallthru
          _
      $region12: #{tpu_custom_call.1} parent=5 // pred_fallthru
        _
      %p146 = scmp.lt.s32.totalorder %s15, 2
      // Predicated region
      $region21: #{tpu_custom_call.1} parent=5 // pred_check
        %p147 = pneg %p146
      $region22: #{tpu_custom_call.1} parent=5 // pred_check_branch
        %149 = sbr.rel (%p147) target = $region24
      $region23: #{tpu_custom_call.1} parent=5 // pred_region
        // Predicated region
        $region25: #{tpu_custom_call.1} parent=23 // pred_check
          %p150 = pneg %p49
        $region26: #{tpu_custom_call.1} parent=23 // pred_check_branch
          %152 = sbr.rel (%p150) target = $region28
        $region27: #{tpu_custom_call.1} parent=23 // pred_region
          %s153 = sand.u32 %s39, 1
          %s154 = scalar_lea.sflag [#allocation4], %s153
          %s155 = sand.u32 %s39, 1
          %s156 = smul.addr %s155, 16
          %s157 = scalar_lea.vmem [#allocation3], %s156
          %s159 = ssub.s32 256, 256
          %160 = vsyncadd %s154, %s159
          %s161 = smul.addr %s23, 2
          %s162 = smul.addr %s22, 2
          %s163 = sadd.s32 %s161, %s162
          %s164 = smul.addr %s163, 128
          %s165 = scalar_lea.hbm %s0, %s164
          %s167 = sshll.u32 %s157, 4
          %s168 = int_to_ptr.vmem [resolvable:$true] %s167
          %170 = dma.hbm_to_vmem [thread:$0]  %s165, 256, %s168, %s154
        $region28: #{tpu_custom_call.1} parent=23 // pred_fallthru
          _
      $region24: #{tpu_custom_call.1} parent=5 // pred_fallthru
        _
      %p171 = scmp.le.s32.totalorder 1, %s15
      %p172 = scmp.lt.s32.totalorder %s15, 3
      %p173 = pnand %p171, %p172
      %p174 = pneg %p173
      // Predicated region
      $region29: #{tpu_custom_call.1} parent=5 // pred_check
        _
      $region30: #{tpu_custom_call.1} parent=5 // pred_check_branch
        %176 = sbr.rel (%p173) target = $region32
      $region31: #{tpu_custom_call.1} parent=5 // pred_region
        %s177 = ssub.s32 %s15, 1
        %s178 = sand.u32 %s42, 1
        %s179 = scalar_lea.sflag [#allocation4], %s178
        %s180 = sand.u32 %s42, 1
        %s181 = smul.addr %s180, 16
        %s182 = scalar_lea.vmem [#allocation3], %s181
        // Predicated region
        $region33: #{tpu_custom_call.1} parent=31 // pred_check
          %p183 = pneg %p55
        $region34: #{tpu_custom_call.1} parent=31 // pred_check_branch
          %185 = sbr.rel (%p183) target = $region36
        $region35: #{tpu_custom_call.1} parent=31 // pred_region
          %186 = dma.done %s179, 256
        $region36: #{tpu_custom_call.1} parent=31 // pred_fallthru
          _
        %s187 = sand.u32 %s42, 1
        %s188 = scalar_lea.sflag [#allocation4], %s187
        %s189 = sand.u32 %s42, 1
        %s190 = smul.addr %s189, 16
        %s191 = scalar_lea.vmem [#allocation3], %s190
        %p192 = pneg %p55
        %p193 = pneg %p52
        %p194 = pneg %p76
        %p195 = pneg %p73
        %p196 = pneg %p97
        %p197 = pneg %p94
        %p198 = pneg %p125
        %p199 = pneg %p122
        %s200 = sand.u32 %s112, 1
        %s201 = scalar_lea.sflag [#allocation5], %s200
        %s202 = sand.u32 %s112, 1
        %s203 = smul.addr %s202, 8
        %s204 = scalar_lea.vmem [#allocation6], %s203
        %vm205 = vcmask 23552
        %206 = vst.msk [vmem:[#allocation2] sm:$0xff] %vm205, 0.0
        %vm207 = vcmask 244952
        %208 = vst.msk [vmem:[#allocation2 + $0x8] sm:$0xff] %vm207, 0.0
        %s209 = smul.u32 %s25, 128
        %v210 = vlaneseq
        %v211 = vand.u32 %v210, 127
        %v212 = vadd.s32 %v211, 128
        %v213 = vstv %s209
        %v214 = vadd.s32 %v213, %v211
        %v215 = vadd.s32 %v213, %v212
        %v216 = vsub.s32 %v214, 12
        %v217 = vsub.s32 %v215, 12
        %vm218 = vcmp.ge.s32.totalorder %v216, 0
        %vm219 = vcmp.ge.s32.totalorder %v217, 0
        %vm220 = vcmp.lt.s32.totalorder %v216, 16
        %vm221 = vcmp.lt.s32.totalorder %v217, 16
        %vm222 = vmand %vm218, %vm220
        %vm223 = vmand %vm219, %vm221
        %v224 = vld [vmem:[%s182] sm:$0xff]
        %v225 = vld [vmem:[%s182 + $0x8] sm:$0xff]
        %vm226 = vcmp.ge.f32.partialorder %v224, 0.0
        %vm227 = vcmp.ge.f32.partialorder %v225, 0.0
        %v228 = vmul.f32 %v224, 0.01
        %v229 = vmul.f32 %v225, 0.01
        %v230 = vsel %vm226, %v224, %v228
        %v231 = vsel %vm227, %v225, %v229
        %v232 = vsel %vm222, %v230, 0.0
        %v233 = vsel %vm223, %v231, 0.0
        %236 = vrot.lane.b32.xlu0 %v232, 3
        %v237 = vpop.permute.xlu0 %236
        %238 = vrot.lane.b32.xlu0 %v233, 3
        %v239 = vpop.permute.xlu0 %238
        %v240 = vsel %vm205, %v237, %v239
        %vm243 = vcmask 1047576
        %244 = vst.msk [vmem:[#allocation2] sm:$0xff] %vm243, %v237
        %vm245 = vcmask 220160
        %246 = vst.msk [vmem:[#allocation2 + $0x8] sm:$0xff] %vm245, %v240
        %v247 = vld [vmem:[#allocation2] sm:$0xff]
        %v248 = vld [vmem:[#allocation2 + $0x8] sm:$0xff]
        %251 = vrot.lane.b32.xlu0 %v247, 127
        %v252 = vpop.permute.xlu0 %251
        %253 = vrot.lane.b32.xlu0 %v248, 127
        %v254 = vpop.permute.xlu0 %253
        %vm255 = vcmask 1039360
        %v256 = vsel %vm255, %v252, %v254
        %257 = vrot.lane.b32.xlu0 %v247, 126
        %v258 = vpop.permute.xlu0 %257
        %259 = vrot.lane.b32.xlu0 %v248, 126
        %v260 = vpop.permute.xlu0 %259
        %vm261 = vcmask 1031168
        %v262 = vsel %vm261, %v258, %v260
        %v263 = vld [vmem:[%s1] sm:$0xff]
        %v264 = vld [vmem:[%s2] sm:$0xff]
        %266 = vset.pattern.permute.xlu0 0
        %267 = vperm.xlu0 %266, %v264
        %v268 = vpop.permute.xlu0 %267
        %270 = vrot.lane.b32.xlu0 %v256, 126
        %v271 = vpop.permute.xlu0 %270
        %272 = vrot.lane.b32.xlu0 %v254, 126
        %v273 = vpop.permute.xlu0 %272
        %274 = vrot.lane.b32.xlu0 %v262, 126
        %v275 = vpop.permute.xlu0 %274
        %276 = vrot.lane.b32.xlu0 %v260, 126
        %v277 = vpop.permute.xlu0 %276
        %v278 = vsel %vm261, %v271, %v273
        %v279 = vsel %vm261, %v275, %v277
        %vm286 = vcmask 195584
        %v288 = vsel %vm286, %v263, 0
        %290 = vmatprep.subr.mxu0 0.0
        %291 = vmatpush1.msra.mxu0 0.0
        %292 = vmatprep.subr.mxu0 0.0
        %293 = vmatpush1.msra.mxu0 0.0
        %294 = vmatprep.subr.mxu0 0.0
        %295 = vmatpush1.msra.mxu0 0.0
        %296 = vmatprep.subr.mxu0 0.0
        %297 = vmatpush1.msra.mxu0 0.0
        %298 = vmatprep.subr.mxu0 0.0
        %299 = vmatpush1.msra.mxu0 0.0
        %300 = vmatprep.subr.mxu0 0.0
        %301 = vmatpush1.msra.mxu0 0.0
        %302 = vmatprep.subr.mxu0 0.0
        %303 = vmatpush1.msra.mxu0 0.0
        %304 = vmatprep.subr.mxu0 0.0
        %305 = vmatpush1.msra.mxu0 0.0
        %306 = vmatprep.subr.mxu0 0.0
        %307 = vmatpush1.msra.mxu0 0.0
        %308 = vmatprep.subr.mxu0 0.0
        %309 = vmatpush1.msra.mxu0 0.0
        %310 = vmatprep.subr.mxu0 0.0
        %311 = vmatpush1.msra.mxu0 0.0
        %312 = vmatprep.subr.mxu0 0.0
        %313 = vmatpush1.msra.mxu0 0.0
        %314 = vmatprep.subr.mxu0 0.0
        %315 = vmatpush1.msra.mxu0 0.0
        %316 = vmatprep.subr.mxu0 %v277
        %317 = vmatpush1.msra.mxu0 %v279
        %318 = vmatprep.subr.mxu0 %v273
        %319 = vmatpush1.msra.mxu0 %v278
        %320 = vmatprep.subr.mxu0 %v260
        %321 = vmatpush1.msra.mxu0 %v262
        %322 = vmatprep.subr.mxu0 0.0
        %323 = vmatpush2.msra.mxu0 0.0
        %324 = vmatprep.subr.mxu0 0.0
        %325 = vmatpush2.msra.mxu0 0.0
        %326 = vmatprep.subr.mxu0 0.0
        %327 = vmatpush2.msra.mxu0 0.0
        %328 = vmatprep.subr.mxu0 0.0
        %329 = vmatpush2.msra.mxu0 0.0
        %330 = vmatprep.subr.mxu0 0.0
        %331 = vmatpush2.msra.mxu0 0.0
        %332 = vmatprep.subr.mxu0 0.0
        %333 = vmatpush2.msra.mxu0 0.0
        %334 = vmatprep.subr.mxu0 0.0
        %335 = vmatpush2.msra.mxu0 0.0
        %336 = vmatprep.subr.mxu0 0.0
        %337 = vmatpush2.msra.mxu0 0.0
        %338 = vmatprep.subr.mxu0 0.0
        %339 = vmatpush2.msra.mxu0 0.0
        %340 = vmatprep.subr.mxu0 0.0
        %341 = vmatpush2.msra.mxu0 0.0
        %342 = vmatprep.subr.mxu0 0.0
        %343 = vmatpush2.msra.mxu0 0.0
        %344 = vmatprep.subr.mxu0 0.0
        %345 = vmatpush2.msra.mxu0 0.0
        %346 = vmatprep.subr.mxu0 0.0
        %347 = vmatpush2.msra.mxu0 0.0
        %348 = vmatprep.subr.mxu0 0.0
        %349 = vmatpush2.msra.mxu0 0.0
        %350 = vmatprep.subr.mxu0 0.0
        %351 = vmatpush2.msra.mxu0 0.0
        %352 = vmatprep.subr.mxu0 0.0
        %353 = vmatpush2.msra.mxu0 0.0
        %354 = vmatprep.mubr.f32.mxu0 0.0
        %355 = vmatmul.mubr.f32.gmra.mxu0 %v288
        %v356 = vpop.f32.mrf.mxu0
        %v357 = vadd.f32 %v268, %v356
        %v358 = vpop.f32.mrf.mxu0
        %v359 = vadd.f32 %v268, %v358
        %360 = vdwg.mxu0
        %vm361 = vcmp.ge.f32.partialorder %v357, 0.0
        %vm362 = vcmp.ge.f32.partialorder %v359, 0.0
        %v363 = vmul.f32 %v357, 0.01
        %v364 = vmul.f32 %v359, 0.01
        %v365 = vsel %vm361, %v357, %v363
        %v366 = vsel %vm362, %v359, %v364
        %v367 = vsel %vm222, %v365, 0.0
        %v368 = vsel %vm223, %v366, 0.0
        %371 = vrot.lane.b32.xlu0 %v367, 3
        %v372 = vpop.permute.xlu0 %371
        %373 = vrot.lane.b32.xlu0 %v368, 3
        %v374 = vpop.permute.xlu0 %373
        %v375 = vsel %vm205, %v372, %v374
        %378 = vst.msk [vmem:[#allocation2] sm:$0xff] %vm243, %v372
        %379 = vst.msk [vmem:[#allocation2 + $0x8] sm:$0xff] %vm245, %v375
        %v380 = vld [vmem:[#allocation2] sm:$0xff]
        %v381 = vld [vmem:[#allocation2 + $0x8] sm:$0xff]
        %384 = vrot.lane.b32.xlu0 %v380, 125
        %v385 = vpop.permute.xlu0 %384
        %386 = vrot.lane.b32.xlu0 %v381, 125
        %v387 = vpop.permute.xlu0 %386
        %vm388 = vcmask 1022976
        %v389 = vsel %vm388, %v385, %v387
        %392 = vrot.lane.b32.xlu0 %v380, 122
        %v393 = vpop.permute.xlu0 %392
        %394 = vrot.lane.b32.xlu0 %v381, 122
        %v395 = vpop.permute.xlu0 %394
        %vm396 = vcmask 998400
        %v397 = vsel %vm396, %v393, %v395
        %s400 = scalar_lea.vmem %s1, 8
        %v401 = vld [vmem:[%s400] sm:$0xff]
        %s402 = scalar_lea.vmem %s2, 8
        %v403 = vld [vmem:[%s402] sm:$0xff]
        %405 = vset.pattern.permute.xlu0 0
        %406 = vperm.xlu0 %405, %v403
        %v407 = vpop.permute.xlu0 %406
        %v410 = vsel %vm286, %v401, 0
        %412 = vmatprep.subr.mxu0 0.0
        %413 = vmatpush1.msra.mxu0 0.0
        %414 = vmatprep.subr.mxu0 0.0
        %415 = vmatpush1.msra.mxu0 0.0
        %416 = vmatprep.subr.mxu0 0.0
        %417 = vmatpush1.msra.mxu0 0.0
        %418 = vmatprep.subr.mxu0 0.0
        %419 = vmatpush1.msra.mxu0 0.0
        %420 = vmatprep.subr.mxu0 0.0
        %421 = vmatpush1.msra.mxu0 0.0
        %422 = vmatprep.subr.mxu0 0.0
        %423 = vmatpush1.msra.mxu0 0.0
        %424 = vmatprep.subr.mxu0 0.0
        %425 = vmatpush1.msra.mxu0 0.0
        %426 = vmatprep.subr.mxu0 0.0
        %427 = vmatpush1.msra.mxu0 0.0
        %428 = vmatprep.subr.mxu0 0.0
        %429 = vmatpush1.msra.mxu0 0.0
        %430 = vmatprep.subr.mxu0 0.0
        %431 = vmatpush1.msra.mxu0 0.0
        %432 = vmatprep.subr.mxu0 0.0
        %433 = vmatpush1.msra.mxu0 0.0
        %434 = vmatprep.subr.mxu0 0.0
        %435 = vmatpush1.msra.mxu0 0.0
        %436 = vmatprep.subr.mxu0 0.0
        %437 = vmatpush1.msra.mxu0 0.0
        %438 = vmatprep.subr.mxu0 %v395
        %439 = vmatpush1.msra.mxu0 %v397
        %440 = vmatprep.subr.mxu0 %v387
        %441 = vmatpush1.msra.mxu0 %v389
        %442 = vmatprep.subr.mxu0 %v381
        %443 = vmatpush1.msra.mxu0 %v380
        %444 = vmatprep.subr.mxu0 0.0
        %445 = vmatpush2.msra.mxu0 0.0
        %446 = vmatprep.subr.mxu0 0.0
        %447 = vmatpush2.msra.mxu0 0.0
        %448 = vmatprep.subr.mxu0 0.0
        %449 = vmatpush2.msra.mxu0 0.0
        %450 = vmatprep.subr.mxu0 0.0
        %451 = vmatpush2.msra.mxu0 0.0
        %452 = vmatprep.subr.mxu0 0.0
        %453 = vmatpush2.msra.mxu0 0.0
        %454 = vmatprep.subr.mxu0 0.0
        %455 = vmatpush2.msra.mxu0 0.0
        %456 = vmatprep.subr.mxu0 0.0
        %457 = vmatpush2.msra.mxu0 0.0
        %458 = vmatprep.subr.mxu0 0.0
        %459 = vmatpush2.msra.mxu0 0.0
        %460 = vmatprep.subr.mxu0 0.0
        %461 = vmatpush2.msra.mxu0 0.0
        %462 = vmatprep.subr.mxu0 0.0
        %463 = vmatpush2.msra.mxu0 0.0
        %464 = vmatprep.subr.mxu0 0.0
        %465 = vmatpush2.msra.mxu0 0.0
        %466 = vmatprep.subr.mxu0 0.0
        %467 = vmatpush2.msra.mxu0 0.0
        %468 = vmatprep.subr.mxu0 0.0
        %469 = vmatpush2.msra.mxu0 0.0
        %470 = vmatprep.subr.mxu0 0.0
        %471 = vmatpush2.msra.mxu0 0.0
        %472 = vmatprep.subr.mxu0 0.0
        %473 = vmatpush2.msra.mxu0 0.0
        %474 = vmatprep.subr.mxu0 0.0
        %475 = vmatpush2.msra.mxu0 0.0
        %476 = vmatprep.mubr.f32.mxu0 0.0
        %477 = vmatmul.mubr.f32.gmra.mxu0 %v410
        %v478 = vpop.f32.mrf.mxu0
        %v479 = vadd.f32 %v407, %v478
        %v480 = vpop.f32.mrf.mxu0
        %v481 = vadd.f32 %v407, %v480
        %482 = vdwg.mxu0
        %v483 = vadd.f32 %v224, %v479
        %v484 = vadd.f32 %v225, %v481
        %vm485 = vcmp.ge.f32.partialorder %v483, 0.0
        %vm486 = vcmp.ge.f32.partialorder %v484, 0.0
        %v487 = vmul.f32 %v483, 0.01
        %v488 = vmul.f32 %v484, 0.01
        %v489 = vsel %vm485, %v483, %v487
        %v490 = vsel %vm486, %v484, %v488
        %v491 = vsel %vm222, %v489, 0.0
        %v492 = vsel %vm223, %v490, 0.0
        %495 = vrot.lane.b32.xlu0 %v491, 3
        %v496 = vpop.permute.xlu0 %495
        %497 = vrot.lane.b32.xlu0 %v492, 3
        %v498 = vpop.permute.xlu0 %497
        %v499 = vsel %vm205, %v496, %v498
        %502 = vst.msk [vmem:[#allocation2] sm:$0xff] %vm243, %v496
        %503 = vst.msk [vmem:[#allocation2 + $0x8] sm:$0xff] %vm245, %v499
        %v504 = vld [vmem:[#allocation2] sm:$0xff]
        %v505 = vld [vmem:[#allocation2 + $0x8] sm:$0xff]
        %508 = vrot.lane.b32.xlu0 %v504, 127
        %v509 = vpop.permute.xlu0 %508
        %510 = vrot.lane.b32.xlu0 %v505, 127
        %v511 = vpop.permute.xlu0 %510
        %v512 = vsel %vm255, %v509, %v511
        %513 = vrot.lane.b32.xlu0 %v504, 126
        %v514 = vpop.permute.xlu0 %513
        %515 = vrot.lane.b32.xlu0 %v505, 126
        %v516 = vpop.permute.xlu0 %515
        %v517 = vsel %vm261, %v514, %v516
        %s518 = scalar_lea.vmem %s1, 16
        %v519 = vld [vmem:[%s518] sm:$0xff]
        %s520 = scalar_lea.vmem %s2, 16
        %v521 = vld [vmem:[%s520] sm:$0xff]
        %523 = vset.pattern.permute.xlu0 0
        %524 = vperm.xlu0 %523, %v521
        %v525 = vpop.permute.xlu0 %524
        %527 = vrot.lane.b32.xlu0 %v512, 126
        %v528 = vpop.permute.xlu0 %527
        %529 = vrot.lane.b32.xlu0 %v511, 126
        %v530 = vpop.permute.xlu0 %529
        %531 = vrot.lane.b32.xlu0 %v517, 126
        %v532 = vpop.permute.xlu0 %531
        %533 = vrot.lane.b32.xlu0 %v516, 126
        %v534 = vpop.permute.xlu0 %533
        %v535 = vsel %vm261, %v528, %v530
        %v536 = vsel %vm261, %v532, %v534
        %v544 = vsel %vm286, %v519, 0
        %546 = vmatprep.subr.mxu0 0.0
        %547 = vmatpush1.msra.mxu0 0.0
        %548 = vmatprep.subr.mxu0 0.0
        %549 = vmatpush1.msra.mxu0 0.0
        %550 = vmatprep.subr.mxu0 0.0
        %551 = vmatpush1.msra.mxu0 0.0
        %552 = vmatprep.subr.mxu0 0.0
        %553 = vmatpush1.msra.mxu0 0.0
        %554 = vmatprep.subr.mxu0 0.0
        %555 = vmatpush1.msra.mxu0 0.0
        %556 = vmatprep.subr.mxu0 0.0
        %557 = vmatpush1.msra.mxu0 0.0
        %558 = vmatprep.subr.mxu0 0.0
        %559 = vmatpush1.msra.mxu0 0.0
        %560 = vmatprep.subr.mxu0 0.0
        %561 = vmatpush1.msra.mxu0 0.0
        %562 = vmatprep.subr.mxu0 0.0
        %563 = vmatpush1.msra.mxu0 0.0
        %564 = vmatprep.subr.mxu0 0.0
        %565 = vmatpush1.msra.mxu0 0.0
        %566 = vmatprep.subr.mxu0 0.0
        %567 = vmatpush1.msra.mxu0 0.0
        %568 = vmatprep.subr.mxu0 0.0
        %569 = vmatpush1.msra.mxu0 0.0
        %570 = vmatprep.subr.mxu0 0.0
        %571 = vmatpush1.msra.mxu0 0.0
        %572 = vmatprep.subr.mxu0 %v534
        %573 = vmatpush1.msra.mxu0 %v536
        %574 = vmatprep.subr.mxu0 %v530
        %575 = vmatpush1.msra.mxu0 %v535
        %576 = vmatprep.subr.mxu0 %v516
        %577 = vmatpush1.msra.mxu0 %v517
        %578 = vmatprep.subr.mxu0 0.0
        %579 = vmatpush2.msra.mxu0 0.0
        %580 = vmatprep.subr.mxu0 0.0
        %581 = vmatpush2.msra.mxu0 0.0
        %582 = vmatprep.subr.mxu0 0.0
        %583 = vmatpush2.msra.mxu0 0.0
        %584 = vmatprep.subr.mxu0 0.0
        %585 = vmatpush2.msra.mxu0 0.0
        %586 = vmatprep.subr.mxu0 0.0
        %587 = vmatpush2.msra.mxu0 0.0
        %588 = vmatprep.subr.mxu0 0.0
        %589 = vmatpush2.msra.mxu0 0.0
        %590 = vmatprep.subr.mxu0 0.0
        %591 = vmatpush2.msra.mxu0 0.0
        %592 = vmatprep.subr.mxu0 0.0
        %593 = vmatpush2.msra.mxu0 0.0
        %594 = vmatprep.subr.mxu0 0.0
        %595 = vmatpush2.msra.mxu0 0.0
        %596 = vmatprep.subr.mxu0 0.0
        %597 = vmatpush2.msra.mxu0 0.0
        %598 = vmatprep.subr.mxu0 0.0
        %599 = vmatpush2.msra.mxu0 0.0
        %600 = vmatprep.subr.mxu0 0.0
        %601 = vmatpush2.msra.mxu0 0.0
        %602 = vmatprep.subr.mxu0 0.0
        %603 = vmatpush2.msra.mxu0 0.0
        %604 = vmatprep.subr.mxu0 0.0
        %605 = vmatpush2.msra.mxu0 0.0
        %606 = vmatprep.subr.mxu0 0.0
        %607 = vmatpush2.msra.mxu0 0.0
        %608 = vmatprep.subr.mxu0 0.0
        %609 = vmatpush2.msra.mxu0 0.0
        %610 = vmatprep.mubr.f32.mxu0 0.0
        %611 = vmatmul.mubr.f32.gmra.mxu0 %v544
        %v612 = vpop.f32.mrf.mxu0
        %v613 = vadd.f32 %v525, %v612
        %v614 = vpop.f32.mrf.mxu0
        %v615 = vadd.f32 %v525, %v614
        %616 = vdwg.mxu0
        %vm617 = vcmp.ge.f32.partialorder %v613, 0.0
        %vm618 = vcmp.ge.f32.partialorder %v615, 0.0
        %v619 = vmul.f32 %v613, 0.01
        %v620 = vmul.f32 %v615, 0.01
        %v621 = vsel %vm617, %v613, %v619
        %v622 = vsel %vm618, %v615, %v620
        %v623 = vsel %vm222, %v621, 0.0
        %v624 = vsel %vm223, %v622, 0.0
        %627 = vrot.lane.b32.xlu0 %v623, 3
        %v628 = vpop.permute.xlu0 %627
        %629 = vrot.lane.b32.xlu0 %v624, 3
        %v630 = vpop.permute.xlu0 %629
        %v631 = vsel %vm205, %v628, %v630
        %634 = vst.msk [vmem:[#allocation2] sm:$0xff] %vm243, %v628
        %635 = vst.msk [vmem:[#allocation2 + $0x8] sm:$0xff] %vm245, %v631
        %v636 = vld [vmem:[#allocation2] sm:$0xff]
        %v637 = vld [vmem:[#allocation2 + $0x8] sm:$0xff]
        %640 = vrot.lane.b32.xlu0 %v636, 125
        %v641 = vpop.permute.xlu0 %640
        %642 = vrot.lane.b32.xlu0 %v637, 125
        %v643 = vpop.permute.xlu0 %642
        %v644 = vsel %vm388, %v641, %v643
        %647 = vrot.lane.b32.xlu0 %v636, 122
        %v648 = vpop.permute.xlu0 %647
        %649 = vrot.lane.b32.xlu0 %v637, 122
        %v650 = vpop.permute.xlu0 %649
        %v651 = vsel %vm396, %v648, %v650
        %s654 = scalar_lea.vmem %s1, 24
        %v655 = vld [vmem:[%s654] sm:$0xff]
        %s656 = scalar_lea.vmem %s2, 24
        %v657 = vld [vmem:[%s656] sm:$0xff]
        %659 = vset.pattern.permute.xlu0 0
        %660 = vperm.xlu0 %659, %v657
        %v661 = vpop.permute.xlu0 %660
        %v664 = vsel %vm286, %v655, 0
        %666 = vmatprep.subr.mxu0 0.0
        %667 = vmatpush1.msra.mxu0 0.0
        %668 = vmatprep.subr.mxu0 0.0
        %669 = vmatpush1.msra.mxu0 0.0
        %670 = vmatprep.subr.mxu0 0.0
        %671 = vmatpush1.msra.mxu0 0.0
        %672 = vmatprep.subr.mxu0 0.0
        %673 = vmatpush1.msra.mxu0 0.0
        %674 = vmatprep.subr.mxu0 0.0
        %675 = vmatpush1.msra.mxu0 0.0
        %676 = vmatprep.subr.mxu0 0.0
        %677 = vmatpush1.msra.mxu0 0.0
        %678 = vmatprep.subr.mxu0 0.0
        %679 = vmatpush1.msra.mxu0 0.0
        %680 = vmatprep.subr.mxu0 0.0
        %681 = vmatpush1.msra.mxu0 0.0
        %682 = vmatprep.subr.mxu0 0.0
        %683 = vmatpush1.msra.mxu0 0.0
        %684 = vmatprep.subr.mxu0 0.0
        %685 = vmatpush1.msra.mxu0 0.0
        %686 = vmatprep.subr.mxu0 0.0
        %687 = vmatpush1.msra.mxu0 0.0
        %688 = vmatprep.subr.mxu0 0.0
        %689 = vmatpush1.msra.mxu0 0.0
        %690 = vmatprep.subr.mxu0 0.0
        %691 = vmatpush1.msra.mxu0 0.0
        %692 = vmatprep.subr.mxu0 %v650
        %693 = vmatpush1.msra.mxu0 %v651
        %694 = vmatprep.subr.mxu0 %v643
        %695 = vmatpush1.msra.mxu0 %v644
        %696 = vmatprep.subr.mxu0 %v637
        %697 = vmatpush1.msra.mxu0 %v636
        %698 = vmatprep.subr.mxu0 0.0
        %699 = vmatpush2.msra.mxu0 0.0
        %700 = vmatprep.subr.mxu0 0.0
        %701 = vmatpush2.msra.mxu0 0.0
        %702 = vmatprep.subr.mxu0 0.0
        %703 = vmatpush2.msra.mxu0 0.0
        %704 = vmatprep.subr.mxu0 0.0
        %705 = vmatpush2.msra.mxu0 0.0
        %706 = vmatprep.subr.mxu0 0.0
        %707 = vmatpush2.msra.mxu0 0.0
        %708 = vmatprep.subr.mxu0 0.0
        %709 = vmatpush2.msra.mxu0 0.0
        %710 = vmatprep.subr.mxu0 0.0
        %711 = vmatpush2.msra.mxu0 0.0
        %712 = vmatprep.subr.mxu0 0.0
        %713 = vmatpush2.msra.mxu0 0.0
        %714 = vmatprep.subr.mxu0 0.0
        %715 = vmatpush2.msra.mxu0 0.0
        %716 = vmatprep.subr.mxu0 0.0
        %717 = vmatpush2.msra.mxu0 0.0
        %718 = vmatprep.subr.mxu0 0.0
        %719 = vmatpush2.msra.mxu0 0.0
        %720 = vmatprep.subr.mxu0 0.0
        %721 = vmatpush2.msra.mxu0 0.0
        %722 = vmatprep.subr.mxu0 0.0
        %723 = vmatpush2.msra.mxu0 0.0
        %724 = vmatprep.subr.mxu0 0.0
        %725 = vmatpush2.msra.mxu0 0.0
        %726 = vmatprep.subr.mxu0 0.0
        %727 = vmatpush2.msra.mxu0 0.0
        %728 = vmatprep.subr.mxu0 0.0
        %729 = vmatpush2.msra.mxu0 0.0
        %730 = vmatprep.mubr.f32.mxu0 0.0
        %731 = vmatmul.mubr.f32.gmra.mxu0 %v664
        %v732 = vpop.f32.mrf.mxu0
        %v733 = vadd.f32 %v661, %v732
        %v734 = vpop.f32.mrf.mxu0
        %v735 = vadd.f32 %v661, %v734
        %736 = vdwg.mxu0
        %v737 = vadd.f32 %v483, %v733
        %v738 = vadd.f32 %v484, %v735
        %vm739 = vcmp.ge.f32.partialorder %v737, 0.0
        %vm740 = vcmp.ge.f32.partialorder %v738, 0.0
        %v741 = vmul.f32 %v737, 0.01
        %v742 = vmul.f32 %v738, 0.01
        %v743 = vsel %vm739, %v737, %v741
        %v744 = vsel %vm740, %v738, %v742
        %v745 = vsel %vm222, %v743, 0.0
        %v746 = vsel %vm223, %v744, 0.0
        %749 = vrot.lane.b32.xlu0 %v745, 3
        %v750 = vpop.permute.xlu0 %749
        %751 = vrot.lane.b32.xlu0 %v746, 3
        %v752 = vpop.permute.xlu0 %751
        %v753 = vsel %vm205, %v750, %v752
        %756 = vst.msk [vmem:[#allocation2] sm:$0xff] %vm243, %v750
        %757 = vst.msk [vmem:[#allocation2 + $0x8] sm:$0xff] %vm245, %v753
        %v758 = vld [vmem:[#allocation2] sm:$0xff]
        %v759 = vld [vmem:[#allocation2 + $0x8] sm:$0xff]
        %762 = vrot.lane.b32.xlu0 %v758, 127
        %v763 = vpop.permute.xlu0 %762
        %764 = vrot.lane.b32.xlu0 %v759, 127
        %v765 = vpop.permute.xlu0 %764
        %v766 = vsel %vm255, %v763, %v765
        %767 = vrot.lane.b32.xlu0 %v758, 126
        %v768 = vpop.permute.xlu0 %767
        %769 = vrot.lane.b32.xlu0 %v759, 126
        %v770 = vpop.permute.xlu0 %769
        %v771 = vsel %vm261, %v768, %v770
        %s772 = scalar_lea.vmem %s1, 32
        %v773 = vld [vmem:[%s772] sm:$0xff]
        %s774 = scalar_lea.vmem %s2, 32
        %v775 = vld [vmem:[%s774] sm:$0xff]
        %777 = vset.pattern.permute.xlu0 0
        %778 = vperm.xlu0 %777, %v775
        %v779 = vpop.permute.xlu0 %778
        %781 = vrot.lane.b32.xlu0 %v766, 126
        %v782 = vpop.permute.xlu0 %781
        %783 = vrot.lane.b32.xlu0 %v765, 126
        %v784 = vpop.permute.xlu0 %783
        %785 = vrot.lane.b32.xlu0 %v771, 126
        %v786 = vpop.permute.xlu0 %785
        %787 = vrot.lane.b32.xlu0 %v770, 126
        %v788 = vpop.permute.xlu0 %787
        %v789 = vsel %vm261, %v782, %v784
        %v790 = vsel %vm261, %v786, %v788
        %v798 = vsel %vm286, %v773, 0
        %800 = vmatprep.subr.mxu0 0.0
        %801 = vmatpush1.msra.mxu0 0.0
        %802 = vmatprep.subr.mxu0 0.0
        %803 = vmatpush1.msra.mxu0 0.0
        %804 = vmatprep.subr.mxu0 0.0
        %805 = vmatpush1.msra.mxu0 0.0
        %806 = vmatprep.subr.mxu0 0.0
        %807 = vmatpush1.msra.mxu0 0.0
        %808 = vmatprep.subr.mxu0 0.0
        %809 = vmatpush1.msra.mxu0 0.0
        %810 = vmatprep.subr.mxu0 0.0
        %811 = vmatpush1.msra.mxu0 0.0
        %812 = vmatprep.subr.mxu0 0.0
        %813 = vmatpush1.msra.mxu0 0.0
        %814 = vmatprep.subr.mxu0 0.0
        %815 = vmatpush1.msra.mxu0 0.0
        %816 = vmatprep.subr.mxu0 0.0
        %817 = vmatpush1.msra.mxu0 0.0
        %818 = vmatprep.subr.mxu0 0.0
        %819 = vmatpush1.msra.mxu0 0.0
        %820 = vmatprep.subr.mxu0 0.0
        %821 = vmatpush1.msra.mxu0 0.0
        %822 = vmatprep.subr.mxu0 0.0
        %823 = vmatpush1.msra.mxu0 0.0
        %824 = vmatprep.subr.mxu0 0.0
        %825 = vmatpush1.msra.mxu0 0.0
        %826 = vmatprep.subr.mxu0 %v788
        %827 = vmatpush1.msra.mxu0 %v790
        %828 = vmatprep.subr.mxu0 %v784
        %829 = vmatpush1.msra.mxu0 %v789
        %830 = vmatprep.subr.mxu0 %v770
        %831 = vmatpush1.msra.mxu0 %v771
        %832 = vmatprep.subr.mxu0 0.0
        %833 = vmatpush2.msra.mxu0 0.0
        %834 = vmatprep.subr.mxu0 0.0
        %835 = vmatpush2.msra.mxu0 0.0
        %836 = vmatprep.subr.mxu0 0.0
        %837 = vmatpush2.msra.mxu0 0.0
        %838 = vmatprep.subr.mxu0 0.0
        %839 = vmatpush2.msra.mxu0 0.0
        %840 = vmatprep.subr.mxu0 0.0
        %841 = vmatpush2.msra.mxu0 0.0
        %842 = vmatprep.subr.mxu0 0.0
        %843 = vmatpush2.msra.mxu0 0.0
        %844 = vmatprep.subr.mxu0 0.0
        %845 = vmatpush2.msra.mxu0 0.0
        %846 = vmatprep.subr.mxu0 0.0
        %847 = vmatpush2.msra.mxu0 0.0
        %848 = vmatprep.subr.mxu0 0.0
        %849 = vmatpush2.msra.mxu0 0.0
        %850 = vmatprep.subr.mxu0 0.0
        %851 = vmatpush2.msra.mxu0 0.0
        %852 = vmatprep.subr.mxu0 0.0
        %853 = vmatpush2.msra.mxu0 0.0
        %854 = vmatprep.subr.mxu0 0.0
        %855 = vmatpush2.msra.mxu0 0.0
        %856 = vmatprep.subr.mxu0 0.0
        %857 = vmatpush2.msra.mxu0 0.0
        %858 = vmatprep.subr.mxu0 0.0
        %859 = vmatpush2.msra.mxu0 0.0
        %860 = vmatprep.subr.mxu0 0.0
        %861 = vmatpush2.msra.mxu0 0.0
        %862 = vmatprep.subr.mxu0 0.0
        %863 = vmatpush2.msra.mxu0 0.0
        %864 = vmatprep.mubr.f32.mxu0 0.0
        %865 = vmatmul.mubr.f32.gmra.mxu0 %v798
        %v866 = vpop.f32.mrf.mxu0
        %v867 = vadd.f32 %v779, %v866
        %v868 = vpop.f32.mrf.mxu0
        %v869 = vadd.f32 %v779, %v868
        %870 = vdwg.mxu0
        %vm871 = vcmp.ge.f32.partialorder %v867, 0.0
        %vm872 = vcmp.ge.f32.partialorder %v869, 0.0
        %v873 = vmul.f32 %v867, 0.01
        %v874 = vmul.f32 %v869, 0.01
        %v875 = vsel %vm871, %v867, %v873
        %v876 = vsel %vm872, %v869, %v874
        %v877 = vsel %vm222, %v875, 0.0
        %v878 = vsel %vm223, %v876, 0.0
        %881 = vrot.lane.b32.xlu0 %v877, 3
        %v882 = vpop.permute.xlu0 %881
        %883 = vrot.lane.b32.xlu0 %v878, 3
        %v884 = vpop.permute.xlu0 %883
        %v885 = vsel %vm205, %v882, %v884
        %888 = vst.msk [vmem:[#allocation2] sm:$0xff] %vm243, %v882
        %889 = vst.msk [vmem:[#allocation2 + $0x8] sm:$0xff] %vm245, %v885
        %v890 = vld [vmem:[#allocation2] sm:$0xff]
        %v891 = vld [vmem:[#allocation2 + $0x8] sm:$0xff]
        %894 = vrot.lane.b32.xlu0 %v890, 125
        %v895 = vpop.permute.xlu0 %894
        %896 = vrot.lane.b32.xlu0 %v891, 125
        %v897 = vpop.permute.xlu0 %896
        %v898 = vsel %vm388, %v895, %v897
        %901 = vrot.lane.b32.xlu0 %v890, 122
        %v902 = vpop.permute.xlu0 %901
        %903 = vrot.lane.b32.xlu0 %v891, 122
        %v904 = vpop.permute.xlu0 %903
        %v905 = vsel %vm396, %v902, %v904
        %s908 = scalar_lea.vmem %s1, 40
        %v909 = vld [vmem:[%s908] sm:$0xff]
        %s910 = scalar_lea.vmem %s2, 40
        %v911 = vld [vmem:[%s910] sm:$0xff]
        %913 = vset.pattern.permute.xlu0 0
        %914 = vperm.xlu0 %913, %v911
        %v915 = vpop.permute.xlu0 %914
        %v918 = vsel %vm286, %v909, 0
        %920 = vmatprep.subr.mxu0 0.0
        %921 = vmatpush1.msra.mxu0 0.0
        %922 = vmatprep.subr.mxu0 0.0
        %923 = vmatpush1.msra.mxu0 0.0
        %924 = vmatprep.subr.mxu0 0.0
        %925 = vmatpush1.msra.mxu0 0.0
        %926 = vmatprep.subr.mxu0 0.0
        %927 = vmatpush1.msra.mxu0 0.0
        %928 = vmatprep.subr.mxu0 0.0
        %929 = vmatpush1.msra.mxu0 0.0
        %930 = vmatprep.subr.mxu0 0.0
        %931 = vmatpush1.msra.mxu0 0.0
        %932 = vmatprep.subr.mxu0 0.0
        %933 = vmatpush1.msra.mxu0 0.0
        %934 = vmatprep.subr.mxu0 0.0
        %935 = vmatpush1.msra.mxu0 0.0
        %936 = vmatprep.subr.mxu0 0.0
        %937 = vmatpush1.msra.mxu0 0.0
        %938 = vmatprep.subr.mxu0 0.0
        %939 = vmatpush1.msra.mxu0 0.0
        %940 = vmatprep.subr.mxu0 0.0
        %941 = vmatpush1.msra.mxu0 0.0
        %942 = vmatprep.subr.mxu0 0.0
        %943 = vmatpush1.msra.mxu0 0.0
        %944 = vmatprep.subr.mxu0 0.0
        %945 = vmatpush1.msra.mxu0 0.0
        %946 = vmatprep.subr.mxu0 %v904
        %947 = vmatpush1.msra.mxu0 %v905
        %948 = vmatprep.subr.mxu0 %v897
        %949 = vmatpush1.msra.mxu0 %v898
        %950 = vmatprep.subr.mxu0 %v891
        %951 = vmatpush1.msra.mxu0 %v890
        %952 = vmatprep.subr.mxu0 0.0
        %953 = vmatpush2.msra.mxu0 0.0
        %954 = vmatprep.subr.mxu0 0.0
        %955 = vmatpush2.msra.mxu0 0.0
        %956 = vmatprep.subr.mxu0 0.0
        %957 = vmatpush2.msra.mxu0 0.0
        %958 = vmatprep.subr.mxu0 0.0
        %959 = vmatpush2.msra.mxu0 0.0
        %960 = vmatprep.subr.mxu0 0.0
        %961 = vmatpush2.msra.mxu0 0.0
        %962 = vmatprep.subr.mxu0 0.0
        %963 = vmatpush2.msra.mxu0 0.0
        %964 = vmatprep.subr.mxu0 0.0
        %965 = vmatpush2.msra.mxu0 0.0
        %966 = vmatprep.subr.mxu0 0.0
        %967 = vmatpush2.msra.mxu0 0.0
        %968 = vmatprep.subr.mxu0 0.0
        %969 = vmatpush2.msra.mxu0 0.0
        %970 = vmatprep.subr.mxu0 0.0
        %971 = vmatpush2.msra.mxu0 0.0
        %972 = vmatprep.subr.mxu0 0.0
        %973 = vmatpush2.msra.mxu0 0.0
        %974 = vmatprep.subr.mxu0 0.0
        %975 = vmatpush2.msra.mxu0 0.0
        %976 = vmatprep.subr.mxu0 0.0
        %977 = vmatpush2.msra.mxu0 0.0
        %978 = vmatprep.subr.mxu0 0.0
        %979 = vmatpush2.msra.mxu0 0.0
        %980 = vmatprep.subr.mxu0 0.0
        %981 = vmatpush2.msra.mxu0 0.0
        %982 = vmatprep.subr.mxu0 0.0
        %983 = vmatpush2.msra.mxu0 0.0
        %984 = vmatprep.mubr.f32.mxu0 0.0
        %985 = vmatmul.mubr.f32.gmra.mxu0 %v918
        %v986 = vpop.f32.mrf.mxu0
        %v987 = vadd.f32 %v915, %v986
        %v988 = vpop.f32.mrf.mxu0
        %v989 = vadd.f32 %v915, %v988
        %990 = vdwg.mxu0
        %v991 = vadd.f32 %v737, %v987
        %v992 = vadd.f32 %v738, %v989
        %995 = vrot.lane.b32.xlu0 %v991, 116
        %v996 = vpop.permute.xlu0 %995
        %997 = vrot.lane.b32.xlu0 %v992, 116
        %v998 = vpop.permute.xlu0 %997
        %vm999 = vcmask 949248
        %v1000 = vsel %vm999, %v996, %v998
        %1002 = vst [vmem:[%s204] sm:$0xff] %v1000
        %s1003 = sand.u32 %s112, 1
        %s1004 = scalar_lea.sflag [#allocation5], %s1003
        %s1005 = sand.u32 %s112, 1
        %s1006 = smul.addr %s1005, 8
        %s1007 = scalar_lea.vmem [#allocation6], %s1006
        // Predicated region
        $region37: #{tpu_custom_call.1} parent=31 // pred_check
          %p1008 = pneg %p122
        $region38: #{tpu_custom_call.1} parent=31 // pred_check_branch
          %1010 = sbr.rel (%p1008) target = $region40
        $region39: #{tpu_custom_call.1} parent=31 // pred_region
          %s1012 = ssub.s32 128, 128
          %1013 = vsyncadd %s1004, %s1012
          %s1014 = sadd.s32 %s25, %s24
          %s1015 = smul.addr %s1014, 128
          %s1016 = scalar_lea.hbm %s3, %s1015
          %s1018 = sshll.u32 %s1007, 4
          %s1019 = int_to_ptr.vmem [resolvable:$true] %s1018
          %1021 = dma.vmem_to_hbm [thread:$0]  %s1019, 128, %s1016, %s1004
        $region40: #{tpu_custom_call.1} parent=31 // pred_fallthru
          _
      $region32: #{tpu_custom_call.1} parent=5 // pred_fallthru
        _
      %p1022 = scmp.le.s32.totalorder 2, %s15
      // Predicated region
      $region41: #{tpu_custom_call.1} parent=5 // pred_check
        %p1023 = pneg %p1022
      $region42: #{tpu_custom_call.1} parent=5 // pred_check_branch
        %1025 = sbr.rel (%p1023) target = $region44
      $region43: #{tpu_custom_call.1} parent=5 // pred_region
        %s1026 = ssub.s32 %s15, 2
        // Predicated region
        $region45: #{tpu_custom_call.1} parent=43 // pred_check
          %p1027 = pneg %p128
        $region46: #{tpu_custom_call.1} parent=43 // pred_check_branch
          %1029 = sbr.rel (%p1027) target = $region48
        $region47: #{tpu_custom_call.1} parent=43 // pred_region
          %s1030 = sand.u32 %s113, 1
          %s1031 = scalar_lea.sflag [#allocation5], %s1030
          %s1032 = sand.u32 %s113, 1
          %s1033 = smul.addr %s1032, 8
          %s1034 = scalar_lea.vmem [#allocation6], %s1033
          %1035 = dma.done %s1031, 128
        $region48: #{tpu_custom_call.1} parent=43 // pred_fallthru
          _
      $region44: #{tpu_custom_call.1} parent=5 // pred_fallthru
        _
    $region6: #{tpu_custom_call.1} parent=1 // loop_footer
      %s19 = sadd.s32 1, %s15
    $region7: #{tpu_custom_call.1} parent=1 // loop_footer_branch
      %14 = sbr.rel target = $region3
    $region8: #{tpu_custom_call.1} parent=1 // loop_exit
      _
    %1036 = vsyncpa [#allocation4], 1
    %s1037 = scalar_lea.sflag [#allocation4], 1
    %1038 = vsyncpa %s1037, 1
    %1039 = vsyncpa [#allocation5], 1
    %s1040 = scalar_lea.sflag [#allocation5], 1
    %1041 = vsyncpa %s1040, 1

</llo_original>
